<compile_context>
chip_gen: v7x
topology: tpu7x:2x2x1
jax: 0.10.0
libtpu: 0.0.40
codegen_flags: <defaults>
</compile_context>

<pallas_src>
import math

import jax
import jax.numpy as jnp
from jax.experimental import pallas as pl
from jax.experimental.pallas import tpu as pltpu


# ---------------------------------------------------------------------------
# Kernels
# ---------------------------------------------------------------------------

def _one_hot_kernel(idx_ref, out_ref):
    """Generic path.  idx_ref: (TN, 1) int32, out_ref: (TN, TC).

    The class-tile offset is applied to the (TN, 1) index column (TC x cheaper
    than adding it to the whole tile) and the class iota is a (1, TC) row that
    the compare broadcasts along sublanes.
    """
    tc = out_ref.shape[1]
    c0 = pl.program_id(1) * tc
    idx = idx_ref[...] - c0                                      # (TN, 1)
    classes = jax.lax.broadcasted_iota(jnp.int32, (1, tc), 1)    # (1, TC)
    out_ref[...] = (idx == classes).astype(out_ref.dtype)


def _make_packed_kernel(k, c):
    """Lane-dense path for small C: pack k = 128 // C rows per output row.

    idx_ref: (TN, k) int32, out_ref: (TN, k * C) with k * C == 128.
    out[r, g*C + j] = (idx[r, g] == j), i.e. lane (g*C + idx[r, g]) is hot.
    Out-of-range indices are clamped to a never-matching target (-1) so they
    produce an all-zero row (same semantics as the generic path).
    """
    def kernel(idx_ref, out_ref):
        lanes = jax.lax.broadcasted_iota(jnp.int32, (1, k * c), 1)   # (1, 128)
        idx = idx_ref[...]                                           # (TN, k)
        valid = (idx >= 0) & (idx < c)
        offs = jax.lax.broadcasted_iota(jnp.int32, (1, k), 1) * c    # (1, k)
        tgt = jnp.where(valid, idx + offs, -1)                       # (TN, k)
        hit = None
        for g in range(k):
            eq = tgt[:, g:g + 1] == lanes                            # (TN, 128)
            hit = eq if hit is None else (hit | eq)
        out_ref[...] = hit.astype(out_ref.dtype)
    return kernel


# ---------------------------------------------------------------------------
# Tiling / VMEM budgeting
# ---------------------------------------------------------------------------

def _sublane_multiple(itemsize):
    return {1: 32, 2: 16}.get(itemsize, 8)


def _vmem_budget_and_limit():
    """(per-block byte budget, scoped vmem_limit_bytes), generation-aware."""
    cap = None
    try:
        cap = int(pltpu.get_tpu_info().vmem_capacity_bytes)
    except Exception:
        cap = None
    if cap is not None and cap >= (100 << 20):
        # v5e / v6e: 128 MiB physical VMEM -> bigger blocks, fewer grid steps.
        return 48 << 20, 96 << 20
    # v7x (64 MiB) or unknown: stay conservative.
    return 22 << 20, 48 << 20


def _choose_tiles(n_rows, lane_width, idx_width, out_itemsize, budget_bytes):
    """Pick (tile_n, tile_c) with layout-padding-aware VMEM accounting."""
    MAX_TILE_C = 8192                      # multiple of 128
    tile_c = lane_width if lane_width <= MAX_TILE_C else MAX_TILE_C

    row_align = _sublane_multiple(out_itemsize)
    if n_rows <= row_align:
        # Tiny input: one exact-shape block (full array dims satisfy the
        # (8, 128) layout rule).
        return n_rows, tile_c

    # Real VMEM footprint: lane dims pad to >=128; double-buffered output
    # blocks plus double-buffered (narrow, lane-padded) index blocks.
    padded_c = max(pl.cdiv(tile_c, 128) * 128, 128)
    padded_idx = max(pl.cdiv(idx_width, 128) * 128, 128)
    bytes_per_row = 2 * padded_c * out_itemsize + 2 * padded_idx * 4
    max_rows = max(row_align, int(budget_bytes // bytes_per_row))
    tile_n = min(4096, max_rows)

    # v7x megacore: keep >=2 steps on the row ("parallel") axis when possible,
    # but never shrink tiles below ~512 rows (DMA efficiency).
    two_core_rows = pl.cdiv(pl.cdiv(n_rows, 2), row_align) * row_align
    tile_n = min(tile_n, max(two_core_rows, 512))
    tile_n = min(tile_n, pl.cdiv(n_rows, row_align) * row_align)
    tile_n = max(row_align, (tile_n // row_align) * row_align)
    return tile_n, tile_c


# ---------------------------------------------------------------------------
# Wrapper
# ---------------------------------------------------------------------------

def one_hot_pallas(x, num_classes, dtype=jnp.int32):
    """Pallas equivalent of torch.nn.functional.one_hot(x, num_classes)."""
    assert num_classes > 0, "num_classes must be given explicitly (no -1 inference)"
    orig_shape = tuple(x.shape)
    n = math.prod(orig_shape) if orig_shape else 1
    final_shape = orig_shape + (num_classes,)

    if n == 0:
        return jnp.zeros(final_shape, dtype=dtype)

    idx = x.reshape(n)
    if idx.dtype != jnp.int32:
        idx = idx.astype(jnp.int32)

    out_itemsize = jnp.dtype(dtype).itemsize
    budget_bytes, vmem_limit = _vmem_budget_and_limit()

    # Lane-dense packing for small class counts (C | 128, C >= 8).
    k = (128 // num_classes) if num_classes < 128 else 1
    use_packed = (
        num_classes < 128
        and 128 % num_classes == 0
        and 2 <= k <= 16
        and n % k == 0
    )

    if use_packed:
        n_rows = n // k
        idx2 = idx.reshape(n_rows, k)
        tile_n, _ = _choose_tiles(n_rows, k * num_classes, k, out_itemsize,
                                  budget_bytes)
        out = pl.pallas_call(
            _make_packed_kernel(k, num_classes),
            out_shape=jax.ShapeDtypeStruct((n_rows, k * num_classes), dtype),
            grid=(pl.cdiv(n_rows, tile_n),),
            in_specs=[pl.BlockSpec((tile_n, k), lambda i: (i, 0))],
            out_specs=pl.BlockSpec((tile_n, k * num_classes), lambda i: (i, 0)),
            compiler_params=pltpu.CompilerParams(
                dimension_semantics=("parallel",),
                vmem_limit_bytes=vmem_limit,
            ),
        )(idx2)
        return out.reshape(final_shape)

    # Generic path (C >= 128, C doesn't divide 128, or n not divisible by k).
    idx2 = idx.reshape(n, 1)
    tile_n, tile_c = _choose_tiles(n, num_classes, 1, out_itemsize, budget_bytes)
    out = pl.pallas_call(
        _one_hot_kernel,
        out_shape=jax.ShapeDtypeStruct((n, num_classes), dtype),
        grid=(pl.cdiv(n, tile_n), pl.cdiv(num_classes, tile_c)),
        in_specs=[pl.BlockSpec((tile_n, 1), lambda i, j: (i, 0))],
        out_specs=pl.BlockSpec((tile_n, tile_c), lambda i, j: (i, j)),
        compiler_params=pltpu.CompilerParams(
            dimension_semantics=("parallel", "parallel"),
            vmem_limit_bytes=vmem_limit,
        ),
    )(idx2)
    return out.reshape(final_shape)


if __name__ == "__main__":
    key = jax.random.PRNGKey(0)

    # 1) Small-C lane-dense (packed) path: label tensor (batch=2, seq=8), 32 classes.
    num_classes = 32
    x = jax.random.randint(key, (2, 8), minval=0, maxval=num_classes, dtype=jnp.int32)
    y = jax.block_until_ready(one_hot_pallas(x, num_classes))
    ref = jax.nn.one_hot(x, num_classes, dtype=jnp.int32)
    assert y.shape == x.shape + (num_classes,), y.shape
    assert y.dtype == jnp.int32
    assert bool(jnp.all(y == ref)), "packed int32 path mismatch"

    # int8 output (recommended when the consumer allows: ~4x less HBM write traffic).
    y8 = jax.block_until_ready(one_hot_pallas(x, num_classes, dtype=jnp.int8))
    assert y8.dtype == jnp.int8
    assert bool(jnp.all(y8.astype(jnp.int32) == ref)), "packed int8 path mismatch"

    # 2) Generic path (class count not a divisor of 128; includes an
    #    out-of-range index -> all-zero row, where torch would raise).
    num_classes2 = 200
    x2 = jax.random.randint(jax.random.PRNGKey(1), (2, 8), 0, num_classes2,
                            dtype=jnp.int32)
    x2 = x2.at[0, 0].set(-1)
    y2 = jax.block_until_ready(one_hot_pallas(x2, num_classes2))
    ref2 = jax.nn.one_hot(x2, num_classes2, dtype=jnp.int32)
    assert y2.shape == x2.shape + (num_classes2,)
    assert bool(jnp.all(y2 == ref2)), "generic path mismatch"

    print("KERNEL_OK")
</pallas_src>

<mosaic_0001>
module attributes {stable_mosaic.version = 11 : i64} {
  func.func @kernel(%arg0: i32, %arg1: memref<4x4xi32, #tpu.memory_space<vmem>>, %arg2: memref<4x128xi32, #tpu.memory_space<vmem>>) attributes {dimension_semantics = [#tpu.dimension_semantics<parallel>], iteration_bounds = array<i64: 1>, scalar_prefetch = 0 : i64, scratch_operands = 0 : i64, tpu.core_type = #tpu.core_type<tc>, window_params = [{transform_indices = @transform_0, window_bounds = array<i64: 4, 4>}, {transform_indices = @transform_1, window_bounds = array<i64: 4, 128>}]} {
    %0 = tpu.iota {dimensions = array<i32: 1>} : vector<1x128xi32>
    %c0 = arith.constant 0 : index
    %c0_0 = arith.constant 0 : index
    %1 = vector.load %arg1[%c0, %c0_0] : memref<4x4xi32, #tpu.memory_space<vmem>>, vector<4x4xi32>
    %c0_i32 = arith.constant 0 : i32
    %2 = vector.broadcast %c0_i32 : i32 to vector<4x4xi32>
    %3 = arith.cmpi sge, %1, %2 : vector<4x4xi32>
    %c32_i32 = arith.constant 32 : i32
    %4 = vector.broadcast %c32_i32 : i32 to vector<4x4xi32>
    %5 = arith.cmpi slt, %1, %4 : vector<4x4xi32>
    %6 = arith.andi %3, %5 : vector<4x4xi1>
    %7 = tpu.iota {dimensions = array<i32: 1>} : vector<1x4xi32>
    %c32_i32_1 = arith.constant 32 : i32
    %8 = vector.broadcast %c32_i32_1 : i32 to vector<1x4xi32>
    %9 = arith.muli %7, %8 : vector<1x4xi32>
    %10 = vector.broadcast %9 : vector<1x4xi32> to vector<4x4xi32>
    %11 = arith.addi %1, %10 : vector<4x4xi32>
    %c-1_i32 = arith.constant -1 : i32
    %12 = vector.broadcast %c-1_i32 : i32 to vector<4x4xi32>
    %13 = arith.select %6, %11, %12 : vector<4x4xi1>, vector<4x4xi32>
    %14 = vector.extract_strided_slice %13 {offsets = [0, 0], sizes = [4, 1], strides = [1, 1]} : vector<4x4xi32> to vector<4x1xi32>
    %15 = vector.broadcast %14 : vector<4x1xi32> to vector<4x128xi32>
    %16 = vector.broadcast %0 : vector<1x128xi32> to vector<4x128xi32>
    %17 = arith.cmpi eq, %15, %16 : vector<4x128xi32>
    %18 = vector.extract_strided_slice %13 {offsets = [0, 1], sizes = [4, 1], strides = [1, 1]} : vector<4x4xi32> to vector<4x1xi32>
    %19 = vector.broadcast %18 : vector<4x1xi32> to vector<4x128xi32>
    %20 = vector.broadcast %0 : vector<1x128xi32> to vector<4x128xi32>
    %21 = arith.cmpi eq, %19, %20 : vector<4x128xi32>
    %22 = arith.ori %17, %21 : vector<4x128xi1>
    %23 = vector.extract_strided_slice %13 {offsets = [0, 2], sizes = [4, 1], strides = [1, 1]} : vector<4x4xi32> to vector<4x1xi32>
    %24 = vector.broadcast %23 : vector<4x1xi32> to vector<4x128xi32>
    %25 = vector.broadcast %0 : vector<1x128xi32> to vector<4x128xi32>
    %26 = arith.cmpi eq, %24, %25 : vector<4x128xi32>
    %27 = arith.ori %22, %26 : vector<4x128xi1>
    %28 = vector.extract_strided_slice %13 {offsets = [0, 3], sizes = [4, 1], strides = [1, 1]} : vector<4x4xi32> to vector<4x1xi32>
    %29 = vector.broadcast %28 : vector<4x1xi32> to vector<4x128xi32>
    %30 = vector.broadcast %0 : vector<1x128xi32> to vector<4x128xi32>
    %31 = arith.cmpi eq, %29, %30 : vector<4x128xi32>
    %32 = arith.ori %27, %31 : vector<4x128xi1>
    %33 = arith.extui %32 : vector<4x128xi1> to vector<4x128xi32>
    %c0_2 = arith.constant 0 : index
    %c0_3 = arith.constant 0 : index
    %34 = vector.load %arg2[%c0_2, %c0_3] : memref<4x128xi32, #tpu.memory_space<vmem>>, vector<4x128xi32>
    tpu.vector_store %arg2[%c0_2, %c0_3], %33 {strides = array<i32>} : memref<4x128xi32, #tpu.memory_space<vmem>>, vector<4x128xi32>,
    return
  }
  func.func @transform_0(%arg0: i32) -> (i32, i32) {
    %c0_i32 = arith.constant 0 : i32
    %c0_i32_0 = arith.constant 0 : i32
    return %arg0, %c0_i32 : i32, i32
  }
  func.func @transform_1(%arg0: i32) -> (i32, i32) {
    %c0_i32 = arith.constant 0 : i32
    %c0_i32_0 = arith.constant 0 : i32
    return %arg0, %c0_i32 : i32, i32
  }
}

</mosaic_0001>

<llo_original>
// kernel: tpu_custom_call.1
$region0: #{tpu_custom_call.1}
  #allocation0 [shape = 'u32[]', space=smem, size = 0x4, offset = 0x4, fixed_abs, tag = 'smem constant byte address 0x4 - core index']
  #allocation1 [shape = 'u32[144,128]{1,0:T(1,128)}', space=vmem, size = 0x12000, scoped, tag = 'internal scratch']
  %s0 = inlined_call_operand.hbm [shape: s32[4,4], index: 0, kind: input, shape index: {}]
  %s1 = inlined_call_operand.hbm [shape: s32[4,128], index: 1, kind: output, shape index: {}]
  %s2 = sld [smem:[#allocation0]]
  $region18: #{tpu_custom_call.1} parent=0
    _
  %s4 = ssub.s32 1, %s2
  %s5 = scalar_select 0, %s4, %s2
  $region1: #{tpu_custom_call.1} parent=0
    #allocation2 [shape = 'u8[2048]{0}', space=vmem, size = 0x800, scoped, tag = 'input window, operand 0, single buffered']
    #allocation3 [shape = 's32[1]{0}', space=sflag, size = 0x4, scoped, tag = 'scoped memory for tpu_custom_call.1']
    #allocation4 [shape = 's32[1]{0}', space=sflag, size = 0x4, scoped, tag = 'scoped memory for tpu_custom_call.1']
    #allocation5 [shape = 'u8[2048]{0}', space=vmem, size = 0x800, scoped, tag = 'output window, operand 0, single buffered']
    %6 = vsyncpa [#allocation3], 0
    %7 = vsyncpa [#allocation4], 0
    // Predicated region
    $region2: #{tpu_custom_call.1} parent=1 // pred_check
      _
    $region3: #{tpu_custom_call.1} parent=1 // pred_check_branch
      %9 = sbr.rel (0) target = $region5
    $region4: #{tpu_custom_call.1} parent=1 // pred_region
      %s11 = ssub.s32 64, 64
      %12 = vsyncadd [#allocation3], %s11
      %s14 = sshll.u32 [#allocation2], 4
      %s15 = int_to_ptr.vmem [resolvable:$true] %s14
      %17 = dma.hbm_to_vmem [thread:$0]  %s0, 64, %s15, [#allocation3]
    $region5: #{tpu_custom_call.1} parent=1 // pred_fallthru
      _
    // Predicated region
    $region6: #{tpu_custom_call.1} parent=1 // pred_check
      _
    $region7: #{tpu_custom_call.1} parent=1 // pred_check_branch
      %19 = sbr.rel (0) target = $region9
    $region8: #{tpu_custom_call.1} parent=1 // pred_region
      %20 = dma.done [#allocation3], 64
    $region9: #{tpu_custom_call.1} parent=1 // pred_fallthru
      _
    %v21 = vlaneseq
    %v22 = vand.u32 %v21, 127
    %v23 = vld [vmem:[#allocation2] sm:$0xf]
    %vm24 = vcmp.ge.s32.totalorder %v23, 0
    %vm25 = vcmp.lt.s32.totalorder %v23, 32
    %vm26 = vmand %vm24, %vm25
    %v27 = vmul.u32 %v22, 32
    %v28 = vadd.s32 %v23, %v27
    %v29 = vsel %vm26, %v28, 4294967295
    %30 = vset.pattern.permute.xlu0 0
    %31 = vperm.xlu0 %30, %v29
    %v32 = vpop.permute.xlu0 %31
    %vm33 = vcmp.eq.s32.totalorder %v32, %v22
    %34 = vset.pattern.permute.xlu0 1
    %35 = vperm.xlu0 %34, %v29
    %v36 = vpop.permute.xlu0 %35
    %vm37 = vcmp.eq.s32.totalorder %v36, %v22
    %vm38 = vmor %vm33, %vm37
    %39 = vset.pattern.permute.xlu0 2
    %40 = vperm.xlu0 %39, %v29
    %v41 = vpop.permute.xlu0 %40
    %vm42 = vcmp.eq.s32.totalorder %v41, %v22
    %vm43 = vmor %vm38, %vm42
    %44 = vset.pattern.permute.xlu0 3
    %45 = vperm.xlu0 %44, %v29
    %v46 = vpop.permute.xlu0 %45
    %vm47 = vcmp.eq.s32.totalorder %v46, %v22
    %vm48 = vmor %vm43, %vm47
    %v49 = vsel %vm48, 1, 0
    %50 = vst [vmem:[#allocation5] sm:$0xf] %v49
    // Predicated region
    $region10: #{tpu_custom_call.1} parent=1 // pred_check
      _
    $region11: #{tpu_custom_call.1} parent=1 // pred_check_branch
      %52 = sbr.rel (0) target = $region13
    $region12: #{tpu_custom_call.1} parent=1 // pred_region
      %s54 = ssub.s32 64, 64
      %55 = vsyncadd [#allocation4], %s54
      %s57 = sshll.u32 [#allocation5], 4
      %s58 = int_to_ptr.vmem [resolvable:$true] %s57
      %60 = dma.vmem_to_hbm [thread:$0]  %s58, 64, %s1, [#allocation4]
    $region13: #{tpu_custom_call.1} parent=1 // pred_fallthru
      _
    // Predicated region
    $region14: #{tpu_custom_call.1} parent=1 // pred_check
      _
    $region15: #{tpu_custom_call.1} parent=1 // pred_check_branch
      %62 = sbr.rel (0) target = $region17
    $region16: #{tpu_custom_call.1} parent=1 // pred_region
      %63 = dma.done [#allocation4], 64
    $region17: #{tpu_custom_call.1} parent=1 // pred_fallthru
      _
    %64 = vsyncpa [#allocation3], 1
    %65 = vsyncpa [#allocation4], 1

</llo_original>
